<compile_context>
chip_gen: v5e
topology: v5e:2x2
jax: 0.10.0
libtpu: 0.0.40
codegen_flags: <defaults>
</compile_context>

<pallas_src>
import jax
import jax.numpy as jnp
from jax.experimental import pallas as pl
from jax.experimental.pallas import tpu as pltpu


def frame_similarity_kernel(x_ref, pw_ref, fw_ref, fb_ref, o_ref):
    # x_ref:  [Bb, C, T, HW]   block of batch samples (source dtype)
    # pw_ref: [C, S]           projection weight (no bias)
    # fw_ref: [L, Op]          fc weight, zero-padded to Op lanes
    # fb_ref: [1, Op]          fc bias, zero-padded to Op lanes
    # o_ref:  [Bb, T, Op]      lane-dense output block
    Bb, C, T, HW = x_ref.shape
    L, Op = fw_ref.shape
    BT = Bb * T
    half = (L - 1) // 2

    # Spatial mean over H*W with fused f32 accumulation (no f32 block copy).
    feat = jnp.mean(x_ref[...], axis=-1, dtype=jnp.float32)          # [Bb, C, T]

    # transpose(1, 2) then stack Bb*T rows: one fused transpose+reshape.
    feat2d = jnp.transpose(feat, (0, 2, 1)).reshape(BT, C)           # [BT, C]

    # projection (Linear, bias=False) on the MXU.
    p = jnp.dot(feat2d, pw_ref[...], preferred_element_type=jnp.float32)  # [BT, S]

    # F.normalize(p=2, dim=2): x / max(||x||, 1e-12) == x * rsqrt(max(||x||^2, 1e-24))
    ss = jnp.sum(p * p, axis=-1, keepdims=True)                      # [BT, 1]
    p = p * jax.lax.rsqrt(jnp.maximum(ss, 1e-24))

    # Row r of the flat [BT, S] slab is time t = r mod T of its batch sample.
    t = jax.lax.broadcasted_iota(jnp.int32, (BT, 1), 0) % T          # [BT, 1]

    # Fused banded-similarity + fc:
    #   out[r, :] = bias + sum_l mask(r,l) * <p[r], p[r + (l-half)]> * fw[l, :]
    # The roll over the flat BT axis only matters for in-range (same-batch)
    # targets; anything crossing a batch/sequence boundary is masked to zero.
    fw = fw_ref[...]                                                 # [L, Op]
    acc = jnp.zeros((BT, Op), jnp.float32)
    for l in range(L):
        d = l - half
        q = p if d == 0 else pltpu.roll(p, shift=(-d) % BT, axis=0)  # [BT, S]
        col = jnp.sum(p * q, axis=-1, keepdims=True)                 # [BT, 1]
        valid = (t + d >= 0) & (t + d < T)                           # [BT, 1]
        col = jnp.where(valid, col, 0.0)
        acc = acc + col * fw[l, :]                                   # [BT, Op]

    out = jnp.maximum(acc + fb_ref[...], 0.0)                        # relu(fc(...))
    o_ref[...] = out.reshape(Bb, T, Op)


def frame_similarity(inputs, proj_w, fc_w, fc_b, lookup_window):
    """inputs: list of [B, C_i, T, H, W]; returns [B, T, output_dim]."""
    feats = jnp.concatenate(inputs, axis=1)                  # [B, C, T, H, W]
    B, C, T, H, W = feats.shape
    HW = H * W
    x = feats.reshape(B, C, T, HW)                           # keep source dtype
    C2, S = proj_w.shape
    L = lookup_window
    O = fc_w.shape[1]

    # Lane-dense output: pad fc to a multiple of 128 output lanes, slice after.
    Op = max(128, ((O + 127) // 128) * 128)
    fw = jnp.zeros((L, Op), jnp.float32).at[:, :O].set(fc_w.astype(jnp.float32))
    fb = jnp.zeros((1, Op), jnp.float32).at[:, :O].set(
        fc_b.reshape(1, O).astype(jnp.float32))

    # Generation-aware VMEM budget.  The x window is double-buffered by the
    # pipeline, so size it to <= (limit - headroom) / 2 and set the scoped
    # limit explicitly (v5e/v6e: 128 MiB physical, v7x: 64 MiB per TC).
    try:
        phys_vmem = int(pltpu.get_tpu_info().vmem_capacity_bytes)
    except Exception:
        phys_vmem = 64 * 1024 * 1024        # conservative fallback (v7x per-TC)
    vmem_limit = int(min(phys_vmem // 2, 64 * 1024 * 1024))
    window = max(1, (vmem_limit - (4 << 20)) // 2)

    bytes_per_sample = C * T * HW * x.dtype.itemsize
    bb = max(1, min(B, window // max(1, bytes_per_sample)))
    if B >= 2:
        bb = min(bb, B // 2)   # >=2 grid steps so v7x's two TCs both get work
    while B % bb:              # exact tiling of the batch axis
        bb -= 1
    # TODO(synk): if a single sample exceeds `window`, additionally tile the HW
    # axis as an innermost 'arbitrary' grid dim with a partial-sum accumulator.

    out = pl.pallas_call(
        frame_similarity_kernel,
        out_shape=jax.ShapeDtypeStruct((B, T, Op), jnp.float32),
        grid_spec=pltpu.PrefetchScalarGridSpec(
            num_scalar_prefetch=0,
            grid=(B // bb,),
            in_specs=[
                pl.BlockSpec((bb, C, T, HW), lambda b: (b, 0, 0, 0)),
                pl.BlockSpec((C2, S), lambda b: (0, 0)),
                pl.BlockSpec((L, Op), lambda b: (0, 0)),
                pl.BlockSpec((1, Op), lambda b: (0, 0)),
            ],
            out_specs=pl.BlockSpec((bb, T, Op), lambda b: (b, 0, 0)),
        ),
        compiler_params=pltpu.CompilerParams(
            dimension_semantics=("parallel",),
            vmem_limit_bytes=vmem_limit),
    )(x, proj_w.astype(jnp.float32), fw, fb)
    return out[:, :, :O]


def frame_similarity_reference(inputs, proj_w, fc_w, fc_b, lookup_window):
    """Pure-JAX reference matching the PyTorch forward semantics."""
    feats = jnp.concatenate([jnp.mean(x, axis=(3, 4)) for x in inputs], axis=1)  # [B,C,T]
    x = jnp.transpose(feats, (0, 2, 1)).astype(jnp.float32)                      # [B,T,C]
    x = x @ proj_w                                                               # [B,T,S]
    n = jnp.sqrt(jnp.sum(x * x, axis=-1, keepdims=True))
    x = x / jnp.maximum(n, 1e-12)
    sim = jnp.einsum("btd,bsd->bts", x, x)                                       # [B,T,T]
    half = (lookup_window - 1) // 2
    padded = jnp.pad(sim, ((0, 0), (0, 0), (half, half)))
    T = sim.shape[1]
    t_idx = jnp.arange(T)[:, None]
    l_idx = jnp.arange(lookup_window)[None, :]
    band = padded[:, t_idx, t_idx + l_idx]                                       # [B,T,L]
    return jax.nn.relu(band @ fc_w + fc_b)


if __name__ == "__main__":
    key = jax.random.PRNGKey(0)
    B, T, H, W = 2, 8, 16, 16
    channels = (4, 4)                 # two feature maps, concatenated on channel dim
    in_filters = sum(channels)        # 8
    similarity_dim = 32
    lookup_window = 11                # must be odd
    output_dim = 16

    k1, k2, k3, k4, k5 = jax.random.split(key, 5)
    inputs = [
        jax.random.normal(k1, (B, channels[0], T, H, W), dtype=jnp.float32),
        jax.random.normal(k2, (B, channels[1], T, H, W), dtype=jnp.float32),
    ]
    # Deterministic synthetic parameters (shapes per nn.Linear in __init__).
    proj_w = 0.1 * jax.random.normal(k3, (in_filters, similarity_dim), jnp.float32)
    fc_w = 0.1 * jax.random.normal(k4, (lookup_window, output_dim), jnp.float32)
    fc_b = 0.1 * jax.random.normal(k5, (output_dim,), jnp.float32)

    out = frame_similarity(inputs, proj_w, fc_w, fc_b, lookup_window)
    out = jax.block_until_ready(out)

    ref = frame_similarity_reference(inputs, proj_w, fc_w, fc_b, lookup_window)
    assert out.shape == (B, T, output_dim), out.shape
    assert jnp.allclose(out, ref, rtol=2e-4, atol=2e-4), float(jnp.max(jnp.abs(out - ref)))
    print("KERNEL_OK")
</pallas_src>

<mosaic_0001>
module attributes {stable_mosaic.version = 11 : i64} {
  func.func @frame_similarity_kernel(%arg0: i32, %arg1: memref<1x8x8x256xf32, #tpu.memory_space<vmem>>, %arg2: memref<8x32xf32, #tpu.memory_space<vmem>>, %arg3: memref<11x128xf32, #tpu.memory_space<vmem>>, %arg4: memref<1x128xf32, #tpu.memory_space<vmem>>, %arg5: memref<1x8x128xf32, #tpu.memory_space<vmem>>) attributes {dimension_semantics = [#tpu.dimension_semantics<parallel>], iteration_bounds = array<i64: 2>, scalar_prefetch = 0 : i64, scratch_operands = 0 : i64, tpu.core_type = #tpu.core_type<tc>, window_params = [{transform_indices = @transform_0, window_bounds = array<i64: 1, 8, 8, 256>}, {pipeline_mode = #tpu.pipeline_mode<synchronous>, transform_indices = @transform_1, window_bounds = array<i64: 8, 32>}, {pipeline_mode = #tpu.pipeline_mode<synchronous>, transform_indices = @transform_2, window_bounds = array<i64: 11, 128>}, {pipeline_mode = #tpu.pipeline_mode<synchronous>, transform_indices = @transform_3, window_bounds = array<i64: 1, 128>}, {transform_indices = @transform_4, window_bounds = array<i64: 1, 8, 128>}]} {
    %c0 = arith.constant 0 : index
    %c0_0 = arith.constant 0 : index
    %c0_1 = arith.constant 0 : index
    %c0_2 = arith.constant 0 : index
    %0 = vector.load %arg1[%c0, %c0_0, %c0_1, %c0_2] : memref<1x8x8x256xf32, #tpu.memory_space<vmem>>, vector<1x8x8x256xf32>
    %cst = arith.constant dense<0.000000e+00> : vector<1x8x8xf32>
    %1 = vector.multi_reduction <add>, %0, %cst [3] : vector<1x8x8x256xf32> to vector<1x8x8xf32>
    %cst_3 = arith.constant 2.560000e+02 : f32
    %2 = vector.broadcast %cst_3 : f32 to vector<1x8x8xf32>
    %3 = arith.divf %1, %2 : vector<1x8x8xf32>
    %4 = tpu.transpose %3, [0, 2, 1] : vector<1x8x8xf32> -> vector<1x8x8xf32>
    %5 = vector.shape_cast %4 : vector<1x8x8xf32> to vector<8x8xf32>
    %c0_4 = arith.constant 0 : index
    %c0_5 = arith.constant 0 : index
    %6 = vector.load %arg2[%c0_4, %c0_5] : memref<8x32xf32, #tpu.memory_space<vmem>>, vector<8x32xf32>
    %cst_6 = arith.constant dense<0.000000e+00> : vector<8x32xf32>
    %7 = tpu.matmul %5, %6, %cst_6 {dimension_numbers = #tpu.dot_dimension_numbers<[1], [0], [0], [1], [0, 0, 1, 1], [], []>} : vector<8x8xf32>, vector<8x32xf32>, vector<8x32xf32> -> vector<8x32xf32>
    %8 = arith.mulf %7, %7 : vector<8x32xf32>
    %cst_7 = arith.constant dense<0.000000e+00> : vector<8xf32>
    %9 = vector.multi_reduction <add>, %8, %cst_7 [1] : vector<8x32xf32> to vector<8xf32>
    %10 = vector.shape_cast %9 : vector<8xf32> to vector<8x1xf32>
    %cst_8 = arith.constant 1.000000e-24 : f32
    %11 = vector.broadcast %cst_8 : f32 to vector<8x1xf32>
    %12 = arith.maximumf %10, %11 : vector<8x1xf32>
    %13 = math.rsqrt %12 : vector<8x1xf32>
    %14 = vector.broadcast %13 : vector<8x1xf32> to vector<8x32xf32>
    %15 = arith.mulf %7, %14 : vector<8x32xf32>
    %16 = tpu.iota {dimensions = array<i32: 0>} : vector<8x1xi32>
    %c8_i32 = arith.constant 8 : i32
    %c0_i32 = arith.constant 0 : i32
    %17 = arith.cmpi eq, %c8_i32, %c0_i32 : i32
    %c1_i32 = arith.constant 1 : i32
    %18 = arith.select %17, %c1_i32, %c8_i32 : i32
    %19 = vector.broadcast %18 : i32 to vector<8x1xi32>
    %20 = arith.remsi %16, %19 : vector<8x1xi32>
    %c0_i32_9 = arith.constant 0 : i32
    %21 = vector.broadcast %c0_i32_9 : i32 to vector<8x1xi32>
    %22 = arith.cmpi ne, %20, %21 : vector<8x1xi32>
    %c0_i32_10 = arith.constant 0 : i32
    %23 = vector.broadcast %c0_i32_10 : i32 to vector<8x1xi32>
    %24 = arith.cmpi slt, %20, %23 : vector<8x1xi32>
    %c0_i32_11 = arith.constant 0 : i32
    %25 = arith.cmpi slt, %18, %c0_i32_11 : i32
    %26 = vector.broadcast %25 : i1 to vector<8x1xi1>
    %27 = vector.broadcast %26 : vector<8x1xi1> to vector<8x1xi1>
    %28 = arith.xori %24, %27 : vector<8x1xi1>
    %29 = arith.andi %28, %22 : vector<8x1xi1>
    %30 = vector.broadcast %18 : i32 to vector<8x1xi32>
    %31 = arith.addi %20, %30 : vector<8x1xi32>
    %32 = arith.select %29, %31, %20 : vector<8x1xi1>, vector<8x1xi32>
    %c0_12 = arith.constant 0 : index
    %c0_13 = arith.constant 0 : index
    %33 = vector.load %arg3[%c0_12, %c0_13] : memref<11x128xf32, #tpu.memory_space<vmem>>, vector<11x128xf32>
    %cst_14 = arith.constant 0.000000e+00 : f32
    %34 = vector.broadcast %cst_14 : f32 to vector<8x128xf32>
    %c5_i32 = arith.constant 5 : i32
    %35 = tpu.dynamic_rotate %15 by %c5_i32 dim 0 : vector<8x32xf32>, i32 -> vector<8x32xf32>
    %36 = arith.mulf %15, %35 : vector<8x32xf32>
    %cst_15 = arith.constant dense<0.000000e+00> : vector<8xf32>
    %37 = vector.multi_reduction <add>, %36, %cst_15 [1] : vector<8x32xf32> to vector<8xf32>
    %38 = vector.shape_cast %37 : vector<8xf32> to vector<8x1xf32>
    %c-5_i32 = arith.constant -5 : i32
    %39 = vector.broadcast %c-5_i32 : i32 to vector<8x1xi32>
    %40 = arith.addi %32, %39 : vector<8x1xi32>
    %c0_i32_16 = arith.constant 0 : i32
    %41 = vector.broadcast %c0_i32_16 : i32 to vector<8x1xi32>
    %42 = arith.cmpi sge, %40, %41 : vector<8x1xi32>
    %c-5_i32_17 = arith.constant -5 : i32
    %43 = vector.broadcast %c-5_i32_17 : i32 to vector<8x1xi32>
    %44 = arith.addi %32, %43 : vector<8x1xi32>
    %c8_i32_18 = arith.constant 8 : i32
    %45 = vector.broadcast %c8_i32_18 : i32 to vector<8x1xi32>
    %46 = arith.cmpi slt, %44, %45 : vector<8x1xi32>
    %47 = arith.andi %42, %46 : vector<8x1xi1>
    %cst_19 = arith.constant 0.000000e+00 : f32
    %48 = vector.broadcast %cst_19 : f32 to vector<8x1xf32>
    %49 = arith.select %47, %38, %48 : vector<8x1xi1>, vector<8x1xf32>
    %50 = vector.extract_strided_slice %33 {offsets = [0, 0], sizes = [1, 128], strides = [1, 1]} : vector<11x128xf32> to vector<1x128xf32>
    %51 = vector.shape_cast %50 : vector<1x128xf32> to vector<128xf32>
    %52 = vector.shape_cast %51 : vector<128xf32> to vector<1x128xf32>
    %53 = vector.broadcast %49 : vector<8x1xf32> to vector<8x128xf32>
    %54 = vector.broadcast %52 : vector<1x128xf32> to vector<8x128xf32>
    %55 = arith.mulf %53, %54 : vector<8x128xf32>
    %56 = arith.addf %34, %55 : vector<8x128xf32>
    %c4_i32 = arith.constant 4 : i32
    %57 = tpu.dynamic_rotate %15 by %c4_i32 dim 0 : vector<8x32xf32>, i32 -> vector<8x32xf32>
    %58 = arith.mulf %15, %57 : vector<8x32xf32>
    %cst_20 = arith.constant dense<0.000000e+00> : vector<8xf32>
    %59 = vector.multi_reduction <add>, %58, %cst_20 [1] : vector<8x32xf32> to vector<8xf32>
    %60 = vector.shape_cast %59 : vector<8xf32> to vector<8x1xf32>
    %c-4_i32 = arith.constant -4 : i32
    %61 = vector.broadcast %c-4_i32 : i32 to vector<8x1xi32>
    %62 = arith.addi %32, %61 : vector<8x1xi32>
    %c0_i32_21 = arith.constant 0 : i32
    %63 = vector.broadcast %c0_i32_21 : i32 to vector<8x1xi32>
    %64 = arith.cmpi sge, %62, %63 : vector<8x1xi32>
    %c-4_i32_22 = arith.constant -4 : i32
    %65 = vector.broadcast %c-4_i32_22 : i32 to vector<8x1xi32>
    %66 = arith.addi %32, %65 : vector<8x1xi32>
    %c8_i32_23 = arith.constant 8 : i32
    %67 = vector.broadcast %c8_i32_23 : i32 to vector<8x1xi32>
    %68 = arith.cmpi slt, %66, %67 : vector<8x1xi32>
    %69 = arith.andi %64, %68 : vector<8x1xi1>
    %cst_24 = arith.constant 0.000000e+00 : f32
    %70 = vector.broadcast %cst_24 : f32 to vector<8x1xf32>
    %71 = arith.select %69, %60, %70 : vector<8x1xi1>, vector<8x1xf32>
    %72 = vector.extract_strided_slice %33 {offsets = [1, 0], sizes = [1, 128], strides = [1, 1]} : vector<11x128xf32> to vector<1x128xf32>
    %73 = vector.shape_cast %72 : vector<1x128xf32> to vector<128xf32>
    %74 = vector.shape_cast %73 : vector<128xf32> to vector<1x128xf32>
    %75 = vector.broadcast %71 : vector<8x1xf32> to vector<8x128xf32>
    %76 = vector.broadcast %74 : vector<1x128xf32> to vector<8x128xf32>
    %77 = arith.mulf %75, %76 : vector<8x128xf32>
    %78 = arith.addf %56, %77 : vector<8x128xf32>
    %c3_i32 = arith.constant 3 : i32
    %79 = tpu.dynamic_rotate %15 by %c3_i32 dim 0 : vector<8x32xf32>, i32 -> vector<8x32xf32>
    %80 = arith.mulf %15, %79 : vector<8x32xf32>
    %cst_25 = arith.constant dense<0.000000e+00> : vector<8xf32>
    %81 = vector.multi_reduction <add>, %80, %cst_25 [1] : vector<8x32xf32> to vector<8xf32>
    %82 = vector.shape_cast %81 : vector<8xf32> to vector<8x1xf32>
    %c-3_i32 = arith.constant -3 : i32
    %83 = vector.broadcast %c-3_i32 : i32 to vector<8x1xi32>
    %84 = arith.addi %32, %83 : vector<8x1xi32>
    %c0_i32_26 = arith.constant 0 : i32
    %85 = vector.broadcast %c0_i32_26 : i32 to vector<8x1xi32>
    %86 = arith.cmpi sge, %84, %85 : vector<8x1xi32>
    %c-3_i32_27 = arith.constant -3 : i32
    %87 = vector.broadcast %c-3_i32_27 : i32 to vector<8x1xi32>
    %88 = arith.addi %32, %87 : vector<8x1xi32>
    %c8_i32_28 = arith.constant 8 : i32
    %89 = vector.broadcast %c8_i32_28 : i32 to vector<8x1xi32>
    %90 = arith.cmpi slt, %88, %89 : vector<8x1xi32>
    %91 = arith.andi %86, %90 : vector<8x1xi1>
    %cst_29 = arith.constant 0.000000e+00 : f32
    %92 = vector.broadcast %cst_29 : f32 to vector<8x1xf32>
    %93 = arith.select %91, %82, %92 : vector<8x1xi1>, vector<8x1xf32>
    %94 = vector.extract_strided_slice %33 {offsets = [2, 0], sizes = [1, 128], strides = [1, 1]} : vector<11x128xf32> to vector<1x128xf32>
    %95 = vector.shape_cast %94 : vector<1x128xf32> to vector<128xf32>
    %96 = vector.shape_cast %95 : vector<128xf32> to vector<1x128xf32>
    %97 = vector.broadcast %93 : vector<8x1xf32> to vector<8x128xf32>
    %98 = vector.broadcast %96 : vector<1x128xf32> to vector<8x128xf32>
    %99 = arith.mulf %97, %98 : vector<8x128xf32>
    %100 = arith.addf %78, %99 : vector<8x128xf32>
    %c2_i32 = arith.constant 2 : i32
    %101 = tpu.dynamic_rotate %15 by %c2_i32 dim 0 : vector<8x32xf32>, i32 -> vector<8x32xf32>
    %102 = arith.mulf %15, %101 : vector<8x32xf32>
    %cst_30 = arith.constant dense<0.000000e+00> : vector<8xf32>
    %103 = vector.multi_reduction <add>, %102, %cst_30 [1] : vector<8x32xf32> to vector<8xf32>
    %104 = vector.shape_cast %103 : vector<8xf32> to vector<8x1xf32>
    %c-2_i32 = arith.constant -2 : i32
    %105 = vector.broadcast %c-2_i32 : i32 to vector<8x1xi32>
    %106 = arith.addi %32, %105 : vector<8x1xi32>
    %c0_i32_31 = arith.constant 0 : i32
    %107 = vector.broadcast %c0_i32_31 : i32 to vector<8x1xi32>
    %108 = arith.cmpi sge, %106, %107 : vector<8x1xi32>
    %c-2_i32_32 = arith.constant -2 : i32
    %109 = vector.broadcast %c-2_i32_32 : i32 to vector<8x1xi32>
    %110 = arith.addi %32, %109 : vector<8x1xi32>
    %c8_i32_33 = arith.constant 8 : i32
    %111 = vector.broadcast %c8_i32_33 : i32 to vector<8x1xi32>
    %112 = arith.cmpi slt, %110, %111 : vector<8x1xi32>
    %113 = arith.andi %108, %112 : vector<8x1xi1>
    %cst_34 = arith.constant 0.000000e+00 : f32
    %114 = vector.broadcast %cst_34 : f32 to vector<8x1xf32>
    %115 = arith.select %113, %104, %114 : vector<8x1xi1>, vector<8x1xf32>
    %116 = vector.extract_strided_slice %33 {offsets = [3, 0], sizes = [1, 128], strides = [1, 1]} : vector<11x128xf32> to vector<1x128xf32>
    %117 = vector.shape_cast %116 : vector<1x128xf32> to vector<128xf32>
    %118 = vector.shape_cast %117 : vector<128xf32> to vector<1x128xf32>
    %119 = vector.broadcast %115 : vector<8x1xf32> to vector<8x128xf32>
    %120 = vector.broadcast %118 : vector<1x128xf32> to vector<8x128xf32>
    %121 = arith.mulf %119, %120 : vector<8x128xf32>
    %122 = arith.addf %100, %121 : vector<8x128xf32>
    %c1_i32_35 = arith.constant 1 : i32
    %123 = tpu.dynamic_rotate %15 by %c1_i32_35 dim 0 : vector<8x32xf32>, i32 -> vector<8x32xf32>
    %124 = arith.mulf %15, %123 : vector<8x32xf32>
    %cst_36 = arith.constant dense<0.000000e+00> : vector<8xf32>
    %125 = vector.multi_reduction <add>, %124, %cst_36 [1] : vector<8x32xf32> to vector<8xf32>
    %126 = vector.shape_cast %125 : vector<8xf32> to vector<8x1xf32>
    %c-1_i32 = arith.constant -1 : i32
    %127 = vector.broadcast %c-1_i32 : i32 to vector<8x1xi32>
    %128 = arith.addi %32, %127 : vector<8x1xi32>
    %c0_i32_37 = arith.constant 0 : i32
    %129 = vector.broadcast %c0_i32_37 : i32 to vector<8x1xi32>
    %130 = arith.cmpi sge, %128, %129 : vector<8x1xi32>
    %c-1_i32_38 = arith.constant -1 : i32
    %131 = vector.broadcast %c-1_i32_38 : i32 to vector<8x1xi32>
    %132 = arith.addi %32, %131 : vector<8x1xi32>
    %c8_i32_39 = arith.constant 8 : i32
    %133 = vector.broadcast %c8_i32_39 : i32 to vector<8x1xi32>
    %134 = arith.cmpi slt, %132, %133 : vector<8x1xi32>
    %135 = arith.andi %130, %134 : vector<8x1xi1>
    %cst_40 = arith.constant 0.000000e+00 : f32
    %136 = vector.broadcast %cst_40 : f32 to vector<8x1xf32>
    %137 = arith.select %135, %126, %136 : vector<8x1xi1>, vector<8x1xf32>
    %138 = vector.extract_strided_slice %33 {offsets = [4, 0], sizes = [1, 128], strides = [1, 1]} : vector<11x128xf32> to vector<1x128xf32>
    %139 = vector.shape_cast %138 : vector<1x128xf32> to vector<128xf32>
    %140 = vector.shape_cast %139 : vector<128xf32> to vector<1x128xf32>
    %141 = vector.broadcast %137 : vector<8x1xf32> to vector<8x128xf32>
    %142 = vector.broadcast %140 : vector<1x128xf32> to vector<8x128xf32>
    %143 = arith.mulf %141, %142 : vector<8x128xf32>
    %144 = arith.addf %122, %143 : vector<8x128xf32>
    %145 = arith.mulf %15, %15 : vector<8x32xf32>
    %cst_41 = arith.constant dense<0.000000e+00> : vector<8xf32>
    %146 = vector.multi_reduction <add>, %145, %cst_41 [1] : vector<8x32xf32> to vector<8xf32>
    %147 = vector.shape_cast %146 : vector<8xf32> to vector<8x1xf32>
    %c0_i32_42 = arith.constant 0 : i32
    %148 = vector.broadcast %c0_i32_42 : i32 to vector<8x1xi32>
    %149 = arith.addi %32, %148 : vector<8x1xi32>
    %c0_i32_43 = arith.constant 0 : i32
    %150 = vector.broadcast %c0_i32_43 : i32 to vector<8x1xi32>
    %151 = arith.cmpi sge, %149, %150 : vector<8x1xi32>
    %c0_i32_44 = arith.constant 0 : i32
    %152 = vector.broadcast %c0_i32_44 : i32 to vector<8x1xi32>
    %153 = arith.addi %32, %152 : vector<8x1xi32>
    %c8_i32_45 = arith.constant 8 : i32
    %154 = vector.broadcast %c8_i32_45 : i32 to vector<8x1xi32>
    %155 = arith.cmpi slt, %153, %154 : vector<8x1xi32>
    %156 = arith.andi %151, %155 : vector<8x1xi1>
    %cst_46 = arith.constant 0.000000e+00 : f32
    %157 = vector.broadcast %cst_46 : f32 to vector<8x1xf32>
    %158 = arith.select %156, %147, %157 : vector<8x1xi1>, vector<8x1xf32>
    %159 = vector.extract_strided_slice %33 {offsets = [5, 0], sizes = [1, 128], strides = [1, 1]} : vector<11x128xf32> to vector<1x128xf32>
    %160 = vector.shape_cast %159 : vector<1x128xf32> to vector<128xf32>
    %161 = vector.shape_cast %160 : vector<128xf32> to vector<1x128xf32>
    %162 = vector.broadcast %158 : vector<8x1xf32> to vector<8x128xf32>
    %163 = vector.broadcast %161 : vector<1x128xf32> to vector<8x128xf32>
    %164 = arith.mulf %162, %163 : vector<8x128xf32>
    %165 = arith.addf %144, %164 : vector<8x128xf32>
    %c7_i32 = arith.constant 7 : i32
    %166 = tpu.dynamic_rotate %15 by %c7_i32 dim 0 : vector<8x32xf32>, i32 -> vector<8x32xf32>
    %167 = arith.mulf %15, %166 : vector<8x32xf32>
    %cst_47 = arith.constant dense<0.000000e+00> : vector<8xf32>
    %168 = vector.multi_reduction <add>, %167, %cst_47 [1] : vector<8x32xf32> to vector<8xf32>
    %169 = vector.shape_cast %168 : vector<8xf32> to vector<8x1xf32>
    %c1_i32_48 = arith.constant 1 : i32
    %170 = vector.broadcast %c1_i32_48 : i32 to vector<8x1xi32>
    %171 = arith.addi %32, %170 : vector<8x1xi32>
    %c0_i32_49 = arith.constant 0 : i32
    %172 = vector.broadcast %c0_i32_49 : i32 to vector<8x1xi32>
    %173 = arith.cmpi sge, %171, %172 : vector<8x1xi32>
    %c1_i32_50 = arith.constant 1 : i32
    %174 = vector.broadcast %c1_i32_50 : i32 to vector<8x1xi32>
    %175 = arith.addi %32, %174 : vector<8x1xi32>
    %c8_i32_51 = arith.constant 8 : i32
    %176 = vector.broadcast %c8_i32_51 : i32 to vector<8x1xi32>
    %177 = arith.cmpi slt, %175, %176 : vector<8x1xi32>
    %178 = arith.andi %173, %177 : vector<8x1xi1>
    %cst_52 = arith.constant 0.000000e+00 : f32
    %179 = vector.broadcast %cst_52 : f32 to vector<8x1xf32>
    %180 = arith.select %178, %169, %179 : vector<8x1xi1>, vector<8x1xf32>
    %181 = vector.extract_strided_slice %33 {offsets = [6, 0], sizes = [1, 128], strides = [1, 1]} : vector<11x128xf32> to vector<1x128xf32>
    %182 = vector.shape_cast %181 : vector<1x128xf32> to vector<128xf32>
    %183 = vector.shape_cast %182 : vector<128xf32> to vector<1x128xf32>
    %184 = vector.broadcast %180 : vector<8x1xf32> to vector<8x128xf32>
    %185 = vector.broadcast %183 : vector<1x128xf32> to vector<8x128xf32>
    %186 = arith.mulf %184, %185 : vector<8x128xf32>
    %187 = arith.addf %165, %186 : vector<8x128xf32>
    %c6_i32 = arith.constant 6 : i32
    %188 = tpu.dynamic_rotate %15 by %c6_i32 dim 0 : vector<8x32xf32>, i32 -> vector<8x32xf32>
    %189 = arith.mulf %15, %188 : vector<8x32xf32>
    %cst_53 = arith.constant dense<0.000000e+00> : vector<8xf32>
    %190 = vector.multi_reduction <add>, %189, %cst_53 [1] : vector<8x32xf32> to vector<8xf32>
    %191 = vector.shape_cast %190 : vector<8xf32> to vector<8x1xf32>
    %c2_i32_54 = arith.constant 2 : i32
    %192 = vector.broadcast %c2_i32_54 : i32 to vector<8x1xi32>
    %193 = arith.addi %32, %192 : vector<8x1xi32>
    %c0_i32_55 = arith.constant 0 : i32
    %194 = vector.broadcast %c0_i32_55 : i32 to vector<8x1xi32>
    %195 = arith.cmpi sge, %193, %194 : vector<8x1xi32>
    %c2_i32_56 = arith.constant 2 : i32
    %196 = vector.broadcast %c2_i32_56 : i32 to vector<8x1xi32>
    %197 = arith.addi %32, %196 : vector<8x1xi32>
    %c8_i32_57 = arith.constant 8 : i32
    %198 = vector.broadcast %c8_i32_57 : i32 to vector<8x1xi32>
    %199 = arith.cmpi slt, %197, %198 : vector<8x1xi32>
    %200 = arith.andi %195, %199 : vector<8x1xi1>
    %cst_58 = arith.constant 0.000000e+00 : f32
    %201 = vector.broadcast %cst_58 : f32 to vector<8x1xf32>
    %202 = arith.select %200, %191, %201 : vector<8x1xi1>, vector<8x1xf32>
    %203 = vector.extract_strided_slice %33 {offsets = [7, 0], sizes = [1, 128], strides = [1, 1]} : vector<11x128xf32> to vector<1x128xf32>
    %204 = vector.shape_cast %203 : vector<1x128xf32> to vector<128xf32>
    %205 = vector.shape_cast %204 : vector<128xf32> to vector<1x128xf32>
    %206 = vector.broadcast %202 : vector<8x1xf32> to vector<8x128xf32>
    %207 = vector.broadcast %205 : vector<1x128xf32> to vector<8x128xf32>
    %208 = arith.mulf %206, %207 : vector<8x128xf32>
    %209 = arith.addf %187, %208 : vector<8x128xf32>
    %c5_i32_59 = arith.constant 5 : i32
    %210 = tpu.dynamic_rotate %15 by %c5_i32_59 dim 0 : vector<8x32xf32>, i32 -> vector<8x32xf32>
    %211 = arith.mulf %15, %210 : vector<8x32xf32>
    %cst_60 = arith.constant dense<0.000000e+00> : vector<8xf32>
    %212 = vector.multi_reduction <add>, %211, %cst_60 [1] : vector<8x32xf32> to vector<8xf32>
    %213 = vector.shape_cast %212 : vector<8xf32> to vector<8x1xf32>
    %c3_i32_61 = arith.constant 3 : i32
    %214 = vector.broadcast %c3_i32_61 : i32 to vector<8x1xi32>
    %215 = arith.addi %32, %214 : vector<8x1xi32>
    %c0_i32_62 = arith.constant 0 : i32
    %216 = vector.broadcast %c0_i32_62 : i32 to vector<8x1xi32>
    %217 = arith.cmpi sge, %215, %216 : vector<8x1xi32>
    %c3_i32_63 = arith.constant 3 : i32
    %218 = vector.broadcast %c3_i32_63 : i32 to vector<8x1xi32>
    %219 = arith.addi %32, %218 : vector<8x1xi32>
    %c8_i32_64 = arith.constant 8 : i32
    %220 = vector.broadcast %c8_i32_64 : i32 to vector<8x1xi32>
    %221 = arith.cmpi slt, %219, %220 : vector<8x1xi32>
    %222 = arith.andi %217, %221 : vector<8x1xi1>
    %cst_65 = arith.constant 0.000000e+00 : f32
    %223 = vector.broadcast %cst_65 : f32 to vector<8x1xf32>
    %224 = arith.select %222, %213, %223 : vector<8x1xi1>, vector<8x1xf32>
    %225 = vector.extract_strided_slice %33 {offsets = [8, 0], sizes = [1, 128], strides = [1, 1]} : vector<11x128xf32> to vector<1x128xf32>
    %226 = vector.shape_cast %225 : vector<1x128xf32> to vector<128xf32>
    %227 = vector.shape_cast %226 : vector<128xf32> to vector<1x128xf32>
    %228 = vector.broadcast %224 : vector<8x1xf32> to vector<8x128xf32>
    %229 = vector.broadcast %227 : vector<1x128xf32> to vector<8x128xf32>
    %230 = arith.mulf %228, %229 : vector<8x128xf32>
    %231 = arith.addf %209, %230 : vector<8x128xf32>
    %c4_i32_66 = arith.constant 4 : i32
    %232 = tpu.dynamic_rotate %15 by %c4_i32_66 dim 0 : vector<8x32xf32>, i32 -> vector<8x32xf32>
    %233 = arith.mulf %15, %232 : vector<8x32xf32>
    %cst_67 = arith.constant dense<0.000000e+00> : vector<8xf32>
    %234 = vector.multi_reduction <add>, %233, %cst_67 [1] : vector<8x32xf32> to vector<8xf32>
    %235 = vector.shape_cast %234 : vector<8xf32> to vector<8x1xf32>
    %c4_i32_68 = arith.constant 4 : i32
    %236 = vector.broadcast %c4_i32_68 : i32 to vector<8x1xi32>
    %237 = arith.addi %32, %236 : vector<8x1xi32>
    %c0_i32_69 = arith.constant 0 : i32
    %238 = vector.broadcast %c0_i32_69 : i32 to vector<8x1xi32>
    %239 = arith.cmpi sge, %237, %238 : vector<8x1xi32>
    %c4_i32_70 = arith.constant 4 : i32
    %240 = vector.broadcast %c4_i32_70 : i32 to vector<8x1xi32>
    %241 = arith.addi %32, %240 : vector<8x1xi32>
    %c8_i32_71 = arith.constant 8 : i32
    %242 = vector.broadcast %c8_i32_71 : i32 to vector<8x1xi32>
    %243 = arith.cmpi slt, %241, %242 : vector<8x1xi32>
    %244 = arith.andi %239, %243 : vector<8x1xi1>
    %cst_72 = arith.constant 0.000000e+00 : f32
    %245 = vector.broadcast %cst_72 : f32 to vector<8x1xf32>
    %246 = arith.select %244, %235, %245 : vector<8x1xi1>, vector<8x1xf32>
    %247 = vector.extract_strided_slice %33 {offsets = [9, 0], sizes = [1, 128], strides = [1, 1]} : vector<11x128xf32> to vector<1x128xf32>
    %248 = vector.shape_cast %247 : vector<1x128xf32> to vector<128xf32>
    %249 = vector.shape_cast %248 : vector<128xf32> to vector<1x128xf32>
    %250 = vector.broadcast %246 : vector<8x1xf32> to vector<8x128xf32>
    %251 = vector.broadcast %249 : vector<1x128xf32> to vector<8x128xf32>
    %252 = arith.mulf %250, %251 : vector<8x128xf32>
    %253 = arith.addf %231, %252 : vector<8x128xf32>
    %c3_i32_73 = arith.constant 3 : i32
    %254 = tpu.dynamic_rotate %15 by %c3_i32_73 dim 0 : vector<8x32xf32>, i32 -> vector<8x32xf32>
    %255 = arith.mulf %15, %254 : vector<8x32xf32>
    %cst_74 = arith.constant dense<0.000000e+00> : vector<8xf32>
    %256 = vector.multi_reduction <add>, %255, %cst_74 [1] : vector<8x32xf32> to vector<8xf32>
    %257 = vector.shape_cast %256 : vector<8xf32> to vector<8x1xf32>
    %c5_i32_75 = arith.constant 5 : i32
    %258 = vector.broadcast %c5_i32_75 : i32 to vector<8x1xi32>
    %259 = arith.addi %32, %258 : vector<8x1xi32>
    %c0_i32_76 = arith.constant 0 : i32
    %260 = vector.broadcast %c0_i32_76 : i32 to vector<8x1xi32>
    %261 = arith.cmpi sge, %259, %260 : vector<8x1xi32>
    %c5_i32_77 = arith.constant 5 : i32
    %262 = vector.broadcast %c5_i32_77 : i32 to vector<8x1xi32>
    %263 = arith.addi %32, %262 : vector<8x1xi32>
    %c8_i32_78 = arith.constant 8 : i32
    %264 = vector.broadcast %c8_i32_78 : i32 to vector<8x1xi32>
    %265 = arith.cmpi slt, %263, %264 : vector<8x1xi32>
    %266 = arith.andi %261, %265 : vector<8x1xi1>
    %cst_79 = arith.constant 0.000000e+00 : f32
    %267 = vector.broadcast %cst_79 : f32 to vector<8x1xf32>
    %268 = arith.select %266, %257, %267 : vector<8x1xi1>, vector<8x1xf32>
    %269 = vector.extract_strided_slice %33 {offsets = [10, 0], sizes = [1, 128], strides = [1, 1]} : vector<11x128xf32> to vector<1x128xf32>
    %270 = vector.shape_cast %269 : vector<1x128xf32> to vector<128xf32>
    %271 = vector.shape_cast %270 : vector<128xf32> to vector<1x128xf32>
    %272 = vector.broadcast %268 : vector<8x1xf32> to vector<8x128xf32>
    %273 = vector.broadcast %271 : vector<1x128xf32> to vector<8x128xf32>
    %274 = arith.mulf %272, %273 : vector<8x128xf32>
    %275 = arith.addf %253, %274 : vector<8x128xf32>
    %c0_80 = arith.constant 0 : index
    %c0_81 = arith.constant 0 : index
    %276 = vector.load %arg4[%c0_80, %c0_81] : memref<1x128xf32, #tpu.memory_space<vmem>>, vector<1x128xf32>
    %277 = vector.broadcast %276 : vector<1x128xf32> to vector<8x128xf32>
    %278 = arith.addf %275, %277 : vector<8x128xf32>
    %cst_82 = arith.constant 0.000000e+00 : f32
    %279 = vector.broadcast %cst_82 : f32 to vector<8x128xf32>
    %280 = arith.maximumf %278, %279 : vector<8x128xf32>
    %281 = vector.shape_cast %280 : vector<8x128xf32> to vector<1x8x128xf32>
    %c0_83 = arith.constant 0 : index
    %c0_84 = arith.constant 0 : index
    %c0_85 = arith.constant 0 : index
    %282 = vector.load %arg5[%c0_83, %c0_84, %c0_85] : memref<1x8x128xf32, #tpu.memory_space<vmem>>, vector<1x8x128xf32>
    tpu.vector_store %arg5[%c0_83, %c0_84, %c0_85], %281 {strides = array<i32>} : memref<1x8x128xf32, #tpu.memory_space<vmem>>, vector<1x8x128xf32>,
    return
  }
  func.func @transform_0(%arg0: i32) -> (i32, i32, i32, i32) {
    %c0_i32 = arith.constant 0 : i32
    %c0_i32_0 = arith.constant 0 : i32
    %c0_i32_1 = arith.constant 0 : i32
    %c0_i32_2 = arith.constant 0 : i32
    return %arg0, %c0_i32, %c0_i32_0, %c0_i32_1 : i32, i32, i32, i32
  }
  func.func @transform_1(%arg0: i32) -> (i32, i32) {
    %c0_i32 = arith.constant 0 : i32
    %c0_i32_0 = arith.constant 0 : i32
    %c0_i32_1 = arith.constant 0 : i32
    return %c0_i32, %c0_i32_0 : i32, i32
  }
  func.func @transform_2(%arg0: i32) -> (i32, i32) {
    %c0_i32 = arith.constant 0 : i32
    %c0_i32_0 = arith.constant 0 : i32
    %c0_i32_1 = arith.constant 0 : i32
    return %c0_i32, %c0_i32_0 : i32, i32
  }
  func.func @transform_3(%arg0: i32) -> (i32, i32) {
    %c0_i32 = arith.constant 0 : i32
    %c0_i32_0 = arith.constant 0 : i32
    %c0_i32_1 = arith.constant 0 : i32
    return %c0_i32, %c0_i32_0 : i32, i32
  }
  func.func @transform_4(%arg0: i32) -> (i32, i32, i32) {
    %c0_i32 = arith.constant 0 : i32
    %c0_i32_0 = arith.constant 0 : i32
    %c0_i32_1 = arith.constant 0 : i32
    return %arg0, %c0_i32, %c0_i32_0 : i32, i32, i32
  }
}

</mosaic_0001>

<llo_original>
// kernel: tpu_custom_call.1
$region0: #{tpu_custom_call.1}
  #allocation0 [shape = 'u32[]', space=smem, size = 0x4, offset = 0x4, fixed_abs, tag = 'smem constant byte address 0x4 - core index']
  #allocation1 [shape = 'u32[72,128]{1,0:T(1,128)}', space=vmem, size = 0x9000, scoped, tag = 'internal scratch']
  %s0 = inlined_call_operand.hbm [shape: f32[2,8,8,256], index: 0, kind: input, shape index: {}]
  %s1 = inlined_call_operand.hbm [shape: f32[8,32], index: 1, kind: input, shape index: {}]
  %s2 = inlined_call_operand.hbm [shape: f32[11,128], index: 2, kind: input, shape index: {}]
  %s3 = inlined_call_operand.vmem [shape: f32[1,128], index: 3, kind: input, shape index: {}]
  %s4 = inlined_call_operand.hbm [shape: f32[2,8,128], index: 4, kind: output, shape index: {}]
  %s5 = sld [smem:[#allocation0]]
  $region61: #{tpu_custom_call.1} parent=0
    _
  %s7 = ssub.s32 1, %s5
  %s8 = scalar_select 0, %s7, %s5
  $region1: #{tpu_custom_call.1} parent=0
    #allocation2 [shape = 'u8[131072]{0}', space=vmem, size = 0x20000, scoped, tag = 'input window, operand 0']
    #allocation3 [shape = 's32[2]{0}', space=sflag, size = 0x8, scoped, tag = 'scoped memory for tpu_custom_call.1']
    #allocation4 [shape = 's32[2]{0}', space=sflag, size = 0x8, scoped, tag = 'scoped memory for tpu_custom_call.1']
    #allocation5 [shape = 'u8[4096]{0}', space=vmem, size = 0x1000, scoped, tag = 'input window, operand 1, single buffered']
    #allocation6 [shape = 's32[1]{0}', space=sflag, size = 0x4, scoped, tag = 'scoped memory for tpu_custom_call.1']
    #allocation7 [shape = 'u8[8192]{0}', space=vmem, size = 0x2000, scoped, tag = 'input window, operand 2, single buffered']
    #allocation8 [shape = 'u8[8192]{0}', space=vmem, size = 0x2000, scoped, tag = 'output window, operand 0']
    %9 = vsyncpa [#allocation3], 0
    %s10 = scalar_lea.sflag [#allocation3], 1
    %11 = vsyncpa %s10, 0
    %12 = vsyncpa [#allocation6], 0
    %13 = vsyncpa [#allocation4], 0
    %s14 = scalar_lea.sflag [#allocation4], 1
    %15 = vsyncpa %s14, 0
    loop: start=0, step=1, limit=4
    $region2: #{tpu_custom_call.1} parent=1 // loop_pre_header
      _
    $region3: #{tpu_custom_call.1} parent=1 // loop_header
      %s17 = sphi 0, %s21
      %p18 = scmp.ge.s32.totalorder %s17, 4
      %s27 = sphi 0, %s29
      %s30 = sphi 0, %s27
      %s31 = sphi 0, %s30
      %s47 = sphi 0, %s31
      %s51 = sphi 0, %s51
      %s53 = sphi 0, %s51
      %s54 = sphi 0, %s53
      %s68 = sphi 0, %s54
      %s72 = sphi 0, %s72
      %s74 = sphi 0, %s72
      %s75 = sphi 0, %s74
      %s89 = sphi 0, %s75
      %s93 = sphi 0, %s93
      %s95 = sphi 0, %s93
      %s96 = sphi 0, %s95
      %s110 = sphi 0, %s96
      %s116 = sphi 0, %s118
      %s119 = sphi 0, %s116
      %s120 = sphi 0, %s119
      %s136 = sphi 0, %s120
    $region4: #{tpu_custom_call.1} parent=1 // loop_header_branch
      %20 = sbr.rel (%p18) target = $region8
    $region5: #{tpu_custom_call.1} parent=1 // loop_body
      %s22 = ssub.s32 %s17, 1
      %s23 = ssub.s32 %s17, 2
      %s24 = sadd.s32 %s17, 1
      %s25 = ssub.s32 %s17, %s24
      %p26 = scmp.eq.s32.totalorder %s25, 0
      %s28 = sadd.s32 %s27, 1
      %s29 = scalar_select %p26, %s27, %s28
      %p32 = pneg %p26
      %p33 = scmp.eq.s32.totalorder %s17, 1
      %p34 = por %p32, %p33
      %p35 = scmp.ne.s32.totalorder %s27, %s30
      %p36 = scmp.eq.s32.totalorder %s17, 0
      %p37 = por %p35, %p36
      %p38 = scmp.ne.s32.totalorder %s27, %s30
      %p39 = scmp.eq.s32.totalorder %s22, 1
      %p40 = por %p38, %p39
      %p41 = scmp.ne.s32.totalorder %s30, %s31
      %p42 = scmp.eq.s32.totalorder %s22, 0
      %p43 = por %p41, %p42
      %p44 = scmp.ne.s32.totalorder %s30, %s31
      %p45 = scmp.eq.s32.totalorder %s23, 1
      %p46 = por %p44, %p45
      %p48 = scmp.ne.s32.totalorder %s31, %s47
      %p49 = scmp.eq.s32.totalorder %s23, 0
      %p50 = por %p48, %p49
      %s52 = sadd.s32 %s51, 1
      %p55 = scmp.eq.s32.totalorder %s17, 1
      %p56 = scmp.ne.s32.totalorder %s51, %s53
      %p57 = scmp.eq.s32.totalorder %s17, 0
      %p58 = por %p56, %p57
      %p59 = scmp.ne.s32.totalorder %s51, %s53
      %p60 = scmp.eq.s32.totalorder %s22, 1
      %p61 = por %p59, %p60
      %p62 = scmp.ne.s32.totalorder %s53, %s54
      %p63 = scmp.eq.s32.totalorder %s22, 0
      %p64 = por %p62, %p63
      %p65 = scmp.ne.s32.totalorder %s53, %s54
      %p66 = scmp.eq.s32.totalorder %s23, 1
      %p67 = por %p65, %p66
      %p69 = scmp.ne.s32.totalorder %s54, %s68
      %p70 = scmp.eq.s32.totalorder %s23, 0
      %p71 = por %p69, %p70
      %s73 = sadd.s32 %s72, 1
      %p76 = scmp.eq.s32.totalorder %s17, 1
      %p77 = scmp.ne.s32.totalorder %s72, %s74
      %p78 = scmp.eq.s32.totalorder %s17, 0
      %p79 = por %p77, %p78
      %p80 = scmp.ne.s32.totalorder %s72, %s74
      %p81 = scmp.eq.s32.totalorder %s22, 1
      %p82 = por %p80, %p81
      %p83 = scmp.ne.s32.totalorder %s74, %s75
      %p84 = scmp.eq.s32.totalorder %s22, 0
      %p85 = por %p83, %p84
      %p86 = scmp.ne.s32.totalorder %s74, %s75
      %p87 = scmp.eq.s32.totalorder %s23, 1
      %p88 = por %p86, %p87
      %p90 = scmp.ne.s32.totalorder %s75, %s89
      %p91 = scmp.eq.s32.totalorder %s23, 0
      %p92 = por %p90, %p91
      %s94 = sadd.s32 %s93, 1
      %p97 = scmp.eq.s32.totalorder %s17, 1
      %p98 = scmp.ne.s32.totalorder %s93, %s95
      %p99 = scmp.eq.s32.totalorder %s17, 0
      %p100 = por %p98, %p99
      %p101 = scmp.ne.s32.totalorder %s93, %s95
      %p102 = scmp.eq.s32.totalorder %s22, 1
      %p103 = por %p101, %p102
      %p104 = scmp.ne.s32.totalorder %s95, %s96
      %p105 = scmp.eq.s32.totalorder %s22, 0
      %p106 = por %p104, %p105
      %p107 = scmp.ne.s32.totalorder %s95, %s96
      %p108 = scmp.eq.s32.totalorder %s23, 1
      %p109 = por %p107, %p108
      %p111 = scmp.ne.s32.totalorder %s96, %s110
      %p112 = scmp.eq.s32.totalorder %s23, 0
      %p113 = por %p111, %p112
      %s114 = ssub.s32 %s17, %s24
      %p115 = scmp.eq.s32.totalorder %s114, 0
      %s117 = sadd.s32 %s116, 1
      %s118 = scalar_select %p115, %s116, %s117
      %p121 = pneg %p115
      %p122 = scmp.eq.s32.totalorder %s17, 1
      %p123 = por %p121, %p122
      %p124 = scmp.ne.s32.totalorder %s116, %s119
      %p125 = scmp.eq.s32.totalorder %s17, 0
      %p126 = por %p124, %p125
      %p127 = scmp.ne.s32.totalorder %s116, %s119
      %p128 = scmp.eq.s32.totalorder %s22, 1
      %p129 = por %p127, %p128
      %p130 = scmp.ne.s32.totalorder %s119, %s120
      %p131 = scmp.eq.s32.totalorder %s22, 0
      %p132 = por %p130, %p131
      %p133 = scmp.ne.s32.totalorder %s119, %s120
      %p134 = scmp.eq.s32.totalorder %s23, 1
      %p135 = por %p133, %p134
      %p137 = scmp.ne.s32.totalorder %s120, %s136
      %p138 = scmp.eq.s32.totalorder %s23, 0
      %p139 = por %p137, %p138
      %p140 = scmp.le.s32.totalorder 1, %s17
      %p141 = scmp.lt.s32.totalorder %s17, 3
      %p142 = pnand %p140, %p141
      %p143 = pneg %p142
      // Predicated region
      $region9: #{tpu_custom_call.1} parent=5 // pred_check
        _
      $region10: #{tpu_custom_call.1} parent=5 // pred_check_branch
        %145 = sbr.rel (%p142) target = $region12
      $region11: #{tpu_custom_call.1} parent=5 // pred_region
        %s146 = ssub.s32 %s17, 1
        // Predicated region
        $region13: #{tpu_custom_call.1} parent=11 // pred_check
          %p147 = pneg %p64
        $region14: #{tpu_custom_call.1} parent=11 // pred_check_branch
          %149 = sbr.rel (%p147) target = $region16
        $region15: #{tpu_custom_call.1} parent=11 // pred_region
          %151 = vsyncadd [#allocation6], 0
          %s153 = sshll.u32 %s1, 4
          %s154 = int_to_ptr.hbm [resolvable:$true] %s153
          %s155 = sshll.u32 [#allocation5], 4
          %s156 = int_to_ptr.vmem [resolvable:$true] %s155
          %158 = dma.hbm_to_vmem [thread:$0]  %s154, 128, %s156, [#allocation6]
        $region16: #{tpu_custom_call.1} parent=11 // pred_fallthru
          _
        // Predicated region
        $region17: #{tpu_custom_call.1} parent=11 // pred_check
          %p159 = pneg %p85
        $region18: #{tpu_custom_call.1} parent=11 // pred_check_branch
          %161 = sbr.rel (%p159) target = $region20
        $region19: #{tpu_custom_call.1} parent=11 // pred_region
          %163 = vsyncadd [#allocation6], 0
          %s164 = sshll.u32 %s2, 4
          %s165 = int_to_ptr.hbm [resolvable:$true] %s164
          %s166 = sshll.u32 [#allocation7], 4
          %s167 = int_to_ptr.vmem [resolvable:$true] %s166
          %172 = dma.hbm_to_vmem [thread:$0]  %s165, 256, %s167, [#allocation6], 128, 128, 8
        $region20: #{tpu_custom_call.1} parent=11 // pred_fallthru
          _
        // Predicated region
        $region21: #{tpu_custom_call.1} parent=11 // pred_check
          %p173 = pneg %p106
        $region22: #{tpu_custom_call.1} parent=11 // pred_check_branch
          %175 = sbr.rel (%p173) target = $region24
        $region23: #{tpu_custom_call.1} parent=11 // pred_region
          _
        $region24: #{tpu_custom_call.1} parent=11 // pred_fallthru
          _
      $region12: #{tpu_custom_call.1} parent=5 // pred_fallthru
        _
      %p176 = scmp.lt.s32.totalorder %s17, 2
      // Predicated region
      $region25: #{tpu_custom_call.1} parent=5 // pred_check
        %p177 = pneg %p176
      $region26: #{tpu_custom_call.1} parent=5 // pred_check_branch
        %179 = sbr.rel (%p177) target = $region28
      $region27: #{tpu_custom_call.1} parent=5 // pred_region
        // Predicated region
        $region29: #{tpu_custom_call.1} parent=27 // pred_check
          %p180 = pneg %p37
        $region30: #{tpu_custom_call.1} parent=27 // pred_check_branch
          %182 = sbr.rel (%p180) target = $region32
        $region31: #{tpu_custom_call.1} parent=27 // pred_region
          %s183 = sand.u32 %s27, 1
          %s184 = scalar_lea.sflag [#allocation3], %s183
          %s185 = sand.u32 %s27, 1
          %s186 = smul.addr %s185, 128
          %s187 = scalar_lea.vmem [#allocation2], %s186
          %189 = vsyncadd %s184, 0
          %s190 = smul.addr %s17, 16
          %s191 = smul.addr %s190, 8
          %s192 = scalar_lea.hbm %s0, %s191
          %s193 = sshll.u32 %s192, 4
          %s194 = int_to_ptr.hbm [resolvable:$true] %s193
          %s195 = sshll.u32 %s187, 4
          %s196 = int_to_ptr.vmem [resolvable:$true] %s195
          %201 = dma.hbm_to_vmem [thread:$0]  %s194, 2048, %s196, %s184, 256, 256, 16
        $region32: #{tpu_custom_call.1} parent=27 // pred_fallthru
          _
      $region28: #{tpu_custom_call.1} parent=5 // pred_fallthru
        _
      %p202 = scmp.le.s32.totalorder 1, %s17
      %p203 = scmp.lt.s32.totalorder %s17, 3
      %p204 = pnand %p202, %p203
      %p205 = pneg %p204
      // Predicated region
      $region33: #{tpu_custom_call.1} parent=5 // pred_check
        _
      $region34: #{tpu_custom_call.1} parent=5 // pred_check_branch
        %207 = sbr.rel (%p204) target = $region36
      $region35: #{tpu_custom_call.1} parent=5 // pred_region
        %s208 = ssub.s32 %s17, 1
        %s209 = sand.u32 %s30, 1
        %s210 = scalar_lea.sflag [#allocation3], %s209
        %s211 = sand.u32 %s30, 1
        %s212 = smul.addr %s211, 128
        %s213 = scalar_lea.vmem [#allocation2], %s212
        // Predicated region
        $region37: #{tpu_custom_call.1} parent=35 // pred_check
          %p214 = pneg %p43
        $region38: #{tpu_custom_call.1} parent=35 // pred_check_branch
          %216 = sbr.rel (%p214) target = $region40
        $region39: #{tpu_custom_call.1} parent=35 // pred_region
          %218 = dma.done %s210, 2048
        $region40: #{tpu_custom_call.1} parent=35 // pred_fallthru
          _
        // Predicated region
        $region41: #{tpu_custom_call.1} parent=35 // pred_check
          %p219 = pneg %p64
        $region42: #{tpu_custom_call.1} parent=35 // pred_check_branch
          %221 = sbr.rel (%p219) target = $region44
        $region43: #{tpu_custom_call.1} parent=35 // pred_region
          %223 = dma.done [#allocation6], 128
        $region44: #{tpu_custom_call.1} parent=35 // pred_fallthru
          _
        // Predicated region
        $region45: #{tpu_custom_call.1} parent=35 // pred_check
          %p224 = pneg %p85
        $region46: #{tpu_custom_call.1} parent=35 // pred_check_branch
          %226 = sbr.rel (%p224) target = $region48
        $region47: #{tpu_custom_call.1} parent=35 // pred_region
          %228 = dma.done [#allocation6], 256
        $region48: #{tpu_custom_call.1} parent=35 // pred_fallthru
          _
        %s229 = sand.u32 %s30, 1
        %s230 = scalar_lea.sflag [#allocation3], %s229
        %s231 = sand.u32 %s30, 1
        %s232 = smul.addr %s231, 128
        %s233 = scalar_lea.vmem [#allocation2], %s232
        %p234 = pneg %p43
        %p235 = pneg %p40
        %p236 = pneg %p64
        %p237 = pneg %p61
        %p238 = pneg %p85
        %p239 = pneg %p82
        %p240 = pneg %p106
        %p241 = pneg %p103
        %p242 = pneg %p132
        %p243 = pneg %p129
        %s244 = sand.u32 %s119, 1
        %s245 = scalar_lea.sflag [#allocation4], %s244
        %s246 = sand.u32 %s119, 1
        %s247 = smul.addr %s246, 8
        %s248 = scalar_lea.vmem [#allocation8], %s247
        %v249 = vld [vmem:[%s213] sm:$0xff]
        %v250 = vld [vmem:[%s213 + $0x8] sm:$0xff]
        %v251 = vld [vmem:[%s213 + $0x10] sm:$0xff]
        %v252 = vld [vmem:[%s213 + $0x18] sm:$0xff]
        %v253 = vld [vmem:[%s213 + $0x20] sm:$0xff]
        %v254 = vld [vmem:[%s213 + $0x28] sm:$0xff]
        %v255 = vld [vmem:[%s213 + $0x30] sm:$0xff]
        %v256 = vld [vmem:[%s213 + $0x38] sm:$0xff]
        %v257 = vld [vmem:[%s213 + $0x40] sm:$0xff]
        %v258 = vld [vmem:[%s213 + $0x48] sm:$0xff]
        %v259 = vld [vmem:[%s213 + $0x50] sm:$0xff]
        %v260 = vld [vmem:[%s213 + $0x58] sm:$0xff]
        %v261 = vld [vmem:[%s213 + $0x60] sm:$0xff]
        %v262 = vld [vmem:[%s213 + $0x68] sm:$0xff]
        %v263 = vld [vmem:[%s213 + $0x70] sm:$0xff]
        %v264 = vld [vmem:[%s213 + $0x78] sm:$0xff]
        %v265 = vadd.f32 %v249, %v250
        %266 = vadd.xlane.f32.xlu0 %v265
        %v267 = vpop.xlane.xlu0 %266
        %v268 = vadd.f32 %v251, %v252
        %269 = vadd.xlane.f32.xlu0 %v268
        %v270 = vpop.xlane.xlu0 %269
        %v271 = vadd.f32 %v253, %v254
        %272 = vadd.xlane.f32.xlu0 %v271
        %v273 = vpop.xlane.xlu0 %272
        %v274 = vadd.f32 %v255, %v256
        %275 = vadd.xlane.f32.xlu0 %v274
        %v276 = vpop.xlane.xlu0 %275
        %v277 = vadd.f32 %v257, %v258
        %278 = vadd.xlane.f32.xlu0 %v277
        %v279 = vpop.xlane.xlu0 %278
        %v280 = vadd.f32 %v259, %v260
        %281 = vadd.xlane.f32.xlu0 %v280
        %v282 = vpop.xlane.xlu0 %281
        %v283 = vadd.f32 %v261, %v262
        %284 = vadd.xlane.f32.xlu0 %v283
        %v285 = vpop.xlane.xlu0 %284
        %v286 = vadd.f32 %v263, %v264
        %287 = vadd.xlane.f32.xlu0 %v286
        %v288 = vpop.xlane.xlu0 %287
        %v289 = vrcp.pop 256.0
        %v290 = vmul.f32 256.0, %v289
        %v291 = vsub.f32 1.0, %v290
        %v292 = vmul.f32 %v289, %v291
        %v293 = vadd.f32 %v289, %v292
        %vm294 = vweird.f32 %v289
        %v295 = vsel %vm294, %v289, %v293
        %v296 = vmul.f32 %v267, %v295
        %v297 = vmul.f32 %v270, %v295
        %v298 = vmul.f32 %v273, %v295
        %v299 = vmul.f32 %v276, %v295
        %v300 = vmul.f32 %v279, %v295
        %v301 = vmul.f32 %v282, %v295
        %v302 = vmul.f32 %v285, %v295
        %v303 = vmul.f32 %v288, %v295
        %v312 = vlaneseq
        %v313 = vand.u32 %v312, 127
        %v314 = vperm.slane %v296, %v313
        %v315 = vperm.slane %v297, %v313
        %v316 = vperm.slane %v298, %v313
        %v317 = vperm.slane %v299, %v313
        %v318 = vperm.slane %v300, %v313
        %v319 = vperm.slane %v301, %v313
        %v320 = vperm.slane %v302, %v313
        %v321 = vperm.slane %v303, %v313
        %vm322 = vcmask 1041409
        %v323 = vsel %vm322, %v315, %v314
        %vm324 = vcmask 1042434
        %v325 = vsel %vm324, %v316, %v323
        %vm326 = vcmask 1043459
        %v327 = vsel %vm326, %v317, %v325
        %vm328 = vcmask 1044484
        %v329 = vsel %vm328, %v318, %v327
        %vm330 = vcmask 1045509
        %v331 = vsel %vm330, %v319, %v329
        %vm332 = vcmask 1046534
        %v333 = vsel %vm332, %v320, %v331
        %vm334 = vcmask 1047559
        %v335 = vsel %vm334, %v321, %v333
        %337 = vxpose.xlu0.b32.start [1/16] %v335, 128
        %338 = vxpose.xlu0.b32.cont [2/16] 0.0, 128
        %339 = vxpose.xlu0.b32.cont [3/16] 0.0, 128
        %340 = vxpose.xlu0.b32.cont [4/16] 0.0, 128
        %341 = vxpose.xlu0.b32.cont [5/16] 0.0, 128
        %342 = vxpose.xlu0.b32.cont [6/16] 0.0, 128
        %343 = vxpose.xlu0.b32.cont [7/16] 0.0, 128
        %344 = vxpose.xlu0.b32.cont [8/16] 0.0, 128
        %345 = vxpose.xlu0.b32.cont [9/16] 0.0, 128
        %346 = vxpose.xlu0.b32.cont [10/16] 0.0, 128
        %347 = vxpose.xlu0.b32.cont [11/16] 0.0, 128
        %348 = vxpose.xlu0.b32.cont [12/16] 0.0, 128
        %349 = vxpose.xlu0.b32.cont [13/16] 0.0, 128
        %350 = vxpose.xlu0.b32.cont [14/16] 0.0, 128
        %351 = vxpose.xlu0.b32.cont [15/16] 0.0, 128
        %352 = vxpose.xlu0.b32.end [16/16] 0.0, 128
        %v353 = vpop.trf.xlu0
        %v354 = vpop.trf.xlu0
        %v355 = vpop.trf.xlu0
        %v356 = vpop.trf.xlu0
        %v357 = vpop.trf.xlu0
        %v358 = vpop.trf.xlu0
        %v359 = vpop.trf.xlu0
        %v360 = vpop.trf.xlu0
        %v361 = vpop.trf.xlu0
        %v362 = vpop.trf.xlu0
        %v363 = vpop.trf.xlu0
        %v364 = vpop.trf.xlu0
        %v365 = vpop.trf.xlu0
        %v366 = vpop.trf.xlu0
        %v367 = vpop.trf.xlu0
        %v368 = vpop.trf.xlu0
        %v369 = vld [vmem:[#allocation5] sm:$0xff]
        %vm370 = vcmask 64512
        %v372 = vsel %vm370, %v353, 0
        %374 = vmatpush.msra.mxu0 0.0
        %375 = vmatpush.msra.mxu0 0.0
        %376 = vmatpush.msra.mxu0 0.0
        %377 = vmatpush.msra.mxu0 0.0
        %378 = vmatpush.msra.mxu0 0.0
        %379 = vmatpush.msra.mxu0 0.0
        %380 = vmatpush.msra.mxu0 0.0
        %381 = vmatpush.msra.mxu0 0.0
        %382 = vmatpush.msra.mxu0 0.0
        %383 = vmatpush.msra.mxu0 0.0
        %384 = vmatpush.msra.mxu0 0.0
        %385 = vmatpush.msra.mxu0 0.0
        %386 = vmatpush.msra.mxu0 0.0
        %387 = vmatpush.msra.mxu0 0.0
        %388 = vmatpush.msra.mxu0 0.0
        %389 = vmatpush.msra.mxu0 %v369
        %390 = vmatmul.f32.gmra.mxu0 %v372
        %v391 = vpop.f32.mrf.mxu0
        %v392 = vadd.f32 0.0, %v391
        %393 = vdwg.mxu0
        %v394 = vmul.f32 %v392, %v392
        %vm395 = vcmask 261120
        %v396 = vsel %vm395, %v394, 0.0
        %397 = vadd.xlane.f32.xlu0 %v396
        %v398 = vpop.xlane.xlu0 %397
        %v399 = vmax.f32 %v398, 1e-24
        %v400 = vrsqrt.pop %v399
        %v401 = vmul.f32 %v400, %v399
        %v402 = vmul.f32 %v401, %v400
        %v403 = vmul.f32 0.5, %v402
        %v404 = vsub.f32 1.5, %v403
        %v405 = vmul.f32 %v400, %v404
        %vm406 = vweird.f32 %v399
        %vm407 = vweird.f32 %v400
        %vm408 = vmor %vm406, %vm407
        %v409 = vsel %vm408, %v400, %v405
        %v410 = vmul.f32 %v392, %v409
        %v411 = vlaneseq
        %v412 = vshrl.u32 %v411, 7
        %vm413 = vcmp.lt.s32.totalorder %v412, 0
        %v414 = vsub.s32 0, %v412
        %v415 = vsel %vm413, %v414, %v412
        %v416 = vshrl.u32 %v415, 3
        %v417 = vand.u32 %v415, 7
        %v418 = vsub.s32 0, %v417
        %v419 = vsel %vm413, %v418, %v417
        %vm420 = vcmp.ne.s32.totalorder %v419, 0
        %vm421 = vcmp.lt.s32.totalorder %v419, 0
        %vm422 = vmand %vm421, %vm420
        %v423 = vadd.s32 %v419, 8
        %v424 = vsel %vm422, %v423, %v419
        %v425 = vld [vmem:[#allocation7] sm:$0xff]
        %v426 = vld [vmem:[#allocation7 + $0x8] sm:$0x7]
        %v427 = vrot.slane %v410, 3
        %v428 = vmul.f32 %v410, %v427
        %v429 = vsel %vm395, %v428, 0.0
        %430 = vadd.xlane.f32.xlu0 %v429
        %v431 = vpop.xlane.xlu0 %430
        %v432 = vadd.s32 %v424, 4294967291
        %vm433 = vcmp.ge.s32.totalorder %v432, 0
        %vm434 = vcmp.lt.s32.totalorder %v432, 8
        %vm435 = vmand %vm433, %vm434
        %v436 = vsel %vm435, %v431, 0.0
        %v437 = vperm.slane %v425, 0
        %v438 = vmul.f32 %v436, %v437
        %v439 = vadd.f32 %v438, 0.0
        %v440 = vrot.slane %v410, 4
        %v441 = vmul.f32 %v410, %v440
        %v442 = vsel %vm395, %v441, 0.0
        %443 = vadd.xlane.f32.xlu0 %v442
        %v444 = vpop.xlane.xlu0 %443
        %v445 = vadd.s32 %v424, 4294967292
        %vm446 = vcmp.ge.s32.totalorder %v445, 0
        %vm447 = vcmp.lt.s32.totalorder %v445, 8
        %vm448 = vmand %vm446, %vm447
        %v449 = vsel %vm448, %v444, 0.0
        %v450 = vperm.slane %v425, 1
        %v451 = vmul.f32 %v449, %v450
        %v452 = vadd.f32 %v439, %v451
        %v453 = vrot.slane %v410, 5
        %v454 = vmul.f32 %v410, %v453
        %v455 = vsel %vm395, %v454, 0.0
        %456 = vadd.xlane.f32.xlu0 %v455
        %v457 = vpop.xlane.xlu0 %456
        %v458 = vadd.s32 %v424, 4294967293
        %vm459 = vcmp.ge.s32.totalorder %v458, 0
        %vm460 = vcmp.lt.s32.totalorder %v458, 8
        %vm461 = vmand %vm459, %vm460
        %v462 = vsel %vm461, %v457, 0.0
        %v463 = vperm.slane %v425, 2
        %v464 = vmul.f32 %v462, %v463
        %v465 = vadd.f32 %v452, %v464
        %v466 = vrot.slane %v410, 6
        %v467 = vmul.f32 %v410, %v466
        %v468 = vsel %vm395, %v467, 0.0
        %469 = vadd.xlane.f32.xlu0 %v468
        %v470 = vpop.xlane.xlu0 %469
        %v471 = vadd.s32 %v424, 4294967294
        %vm472 = vcmp.ge.s32.totalorder %v471, 0
        %vm473 = vcmp.lt.s32.totalorder %v471, 8
        %vm474 = vmand %vm472, %vm473
        %v475 = vsel %vm474, %v470, 0.0
        %v476 = vperm.slane %v425, 3
        %v477 = vmul.f32 %v475, %v476
        %v478 = vadd.f32 %v465, %v477
        %v479 = vrot.slane %v410, 7
        %v480 = vmul.f32 %v410, %v479
        %v481 = vsel %vm395, %v480, 0.0
        %482 = vadd.xlane.f32.xlu0 %v481
        %v483 = vpop.xlane.xlu0 %482
        %v484 = vadd.s32 %v424, 4294967295
        %vm485 = vcmp.ge.s32.totalorder %v484, 0
        %vm486 = vcmp.lt.s32.totalorder %v484, 8
        %vm487 = vmand %vm485, %vm486
        %v488 = vsel %vm487, %v483, 0.0
        %v489 = vperm.slane %v425, 4
        %v490 = vmul.f32 %v488, %v489
        %v491 = vadd.f32 %v478, %v490
        %v492 = vmul.f32 %v410, %v410
        %v493 = vsel %vm395, %v492, 0.0
        %494 = vadd.xlane.f32.xlu0 %v493
        %v495 = vpop.xlane.xlu0 %494
        %vm496 = vcmp.ge.s32.totalorder %v424, 0
        %vm497 = vcmp.lt.s32.totalorder %v424, 8
        %vm498 = vmand %vm496, %vm497
        %v499 = vsel %vm498, %v495, 0.0
        %v500 = vperm.slane %v425, 5
        %v501 = vmul.f32 %v499, %v500
        %v502 = vadd.f32 %v491, %v501
        %v503 = vrot.slane %v410, 1
        %v504 = vmul.f32 %v410, %v503
        %v505 = vsel %vm395, %v504, 0.0
        %506 = vadd.xlane.f32.xlu0 %v505
        %v507 = vpop.xlane.xlu0 %506
        %v508 = vadd.s32 %v424, 1
        %vm509 = vcmp.ge.s32.totalorder %v508, 0
        %vm510 = vcmp.lt.s32.totalorder %v508, 8
        %vm511 = vmand %vm509, %vm510
        %v512 = vsel %vm511, %v507, 0.0
        %v513 = vperm.slane %v425, 6
        %v514 = vmul.f32 %v512, %v513
        %v515 = vadd.f32 %v502, %v514
        %v516 = vrot.slane %v410, 2
        %v517 = vmul.f32 %v410, %v516
        %v518 = vsel %vm395, %v517, 0.0
        %519 = vadd.xlane.f32.xlu0 %v518
        %v520 = vpop.xlane.xlu0 %519
        %v521 = vadd.s32 %v424, 2
        %vm522 = vcmp.ge.s32.totalorder %v521, 0
        %vm523 = vcmp.lt.s32.totalorder %v521, 8
        %vm524 = vmand %vm522, %vm523
        %v525 = vsel %vm524, %v520, 0.0
        %v526 = vperm.slane %v425, 7
        %v527 = vmul.f32 %v525, %v526
        %v528 = vadd.f32 %v515, %v527
        %v529 = vadd.s32 %v424, 3
        %vm530 = vcmp.ge.s32.totalorder %v529, 0
        %vm531 = vcmp.lt.s32.totalorder %v529, 8
        %vm532 = vmand %vm530, %vm531
        %v533 = vsel %vm532, %v431, 0.0
        %v534 = vperm.slane %v426, 0
        %v535 = vmul.f32 %v533, %v534
        %v536 = vadd.f32 %v528, %v535
        %v537 = vadd.s32 %v424, 4
        %vm538 = vcmp.ge.s32.totalorder %v537, 0
        %vm539 = vcmp.lt.s32.totalorder %v537, 8
        %vm540 = vmand %vm538, %vm539
        %v541 = vsel %vm540, %v444, 0.0
        %v542 = vperm.slane %v426, 1
        %v543 = vmul.f32 %v541, %v542
        %v544 = vadd.f32 %v536, %v543
        %v545 = vadd.s32 %v424, 5
        %vm546 = vcmp.ge.s32.totalorder %v545, 0
        %vm547 = vcmp.lt.s32.totalorder %v545, 8
        %vm548 = vmand %vm546, %vm547
        %v549 = vsel %vm548, %v457, 0.0
        %v550 = vperm.slane %v426, 2
        %v551 = vmul.f32 %v549, %v550
        %v552 = vadd.f32 %v544, %v551
        %v553 = vld [vmem:[%s3] sm:$0x1]
        %v555 = vperm.slane %v553, 0
        %v557 = vadd.f32 %v552, %v555
        %v558 = vmax.f32 %v557, 0.0
        %559 = vst [vmem:[%s248] sm:$0xff] %v558
        %s560 = sand.u32 %s119, 1
        %s561 = scalar_lea.sflag [#allocation4], %s560
        %s562 = sand.u32 %s119, 1
        %s563 = smul.addr %s562, 8
        %s564 = scalar_lea.vmem [#allocation8], %s563
        // Predicated region
        $region49: #{tpu_custom_call.1} parent=35 // pred_check
          %p565 = pneg %p129
        $region50: #{tpu_custom_call.1} parent=35 // pred_check_branch
          %567 = sbr.rel (%p565) target = $region52
        $region51: #{tpu_custom_call.1} parent=35 // pred_region
          %569 = vsyncadd %s561, 0
          %s570 = smul.addr %s22, 8
          %s571 = scalar_lea.hbm %s4, %s570
          %s573 = sshll.u32 %s564, 4
          %s574 = int_to_ptr.vmem [resolvable:$true] %s573
          %s575 = sshll.u32 %s571, 4
          %s576 = int_to_ptr.hbm [resolvable:$true] %s575
          %578 = dma.vmem_to_hbm [thread:$0]  %s574, 128, %s576, %s561
        $region52: #{tpu_custom_call.1} parent=35 // pred_fallthru
          _
      $region36: #{tpu_custom_call.1} parent=5 // pred_fallthru
        _
      %p579 = scmp.le.s32.totalorder 2, %s17
      // Predicated region
      $region53: #{tpu_custom_call.1} parent=5 // pred_check
        %p580 = pneg %p579
      $region54: #{tpu_custom_call.1} parent=5 // pred_check_branch
        %582 = sbr.rel (%p580) target = $region56
      $region55: #{tpu_custom_call.1} parent=5 // pred_region
        %s583 = ssub.s32 %s17, 2
        // Predicated region
        $region57: #{tpu_custom_call.1} parent=55 // pred_check
          %p584 = pneg %p135
        $region58: #{tpu_custom_call.1} parent=55 // pred_check_branch
          %586 = sbr.rel (%p584) target = $region60
        $region59: #{tpu_custom_call.1} parent=55 // pred_region
          %s587 = sand.u32 %s120, 1
          %s588 = scalar_lea.sflag [#allocation4], %s587
          %s589 = sand.u32 %s120, 1
          %s590 = smul.addr %s589, 8
          %s591 = scalar_lea.vmem [#allocation8], %s590
          %593 = dma.done %s588, 128
        $region60: #{tpu_custom_call.1} parent=55 // pred_fallthru
          _
      $region56: #{tpu_custom_call.1} parent=5 // pred_fallthru
        _
    $region6: #{tpu_custom_call.1} parent=1 // loop_footer
      %s21 = sadd.s32 1, %s17
    $region7: #{tpu_custom_call.1} parent=1 // loop_footer_branch
      %16 = sbr.rel target = $region3
    $region8: #{tpu_custom_call.1} parent=1 // loop_exit
      _
    %594 = vsyncpa [#allocation3], 1
    %s595 = scalar_lea.sflag [#allocation3], 1
    %596 = vsyncpa %s595, 1
    %597 = vsyncpa [#allocation6], 1
    %598 = vsyncpa [#allocation4], 1
    %s599 = scalar_lea.sflag [#allocation4], 1
    %600 = vsyncpa %s599, 1

</llo_original>
